<compile_context>
chip_gen: v5e
topology: v5e:2x2
jax: 0.10.0
libtpu: 0.0.40
codegen_flags: <defaults>
</compile_context>

<pallas_src>
from functools import partial

import jax
import jax.numpy as jnp
from jax.experimental import pallas as pl
from jax.experimental.pallas import tpu as pltpu


def _focal_loss_kernel(x_ref, tgt_ref, alpha_ref, out_ref, acc_ref, *,
                       gamma, n_valid, size_average):
    """One row-tile of focal loss; accumulates the scalar sum across the grid."""
    step = pl.program_id(0)

    @pl.when(step == 0)
    def _init():
        acc_ref[...] = jnp.zeros_like(acc_ref)

    x = x_ref[...].astype(jnp.float32)            # (TM, C) logits
    tgt = tgt_ref[...]                            # (TM, 1) int32 class ids
    alpha = alpha_ref[...].astype(jnp.float32)    # (1,  C) per-class weights

    # Numerically stable log-softmax over the class (lane) axis.
    x_max = jnp.max(x, axis=-1, keepdims=True)
    z = x - x_max
    lse = jnp.log(jnp.sum(jnp.exp(z), axis=-1, keepdims=True))
    logp = z - lse                                # (TM, C)

    # One-hot "gather" of the target class along lanes.
    class_ids = jax.lax.broadcasted_iota(jnp.int32, x.shape, dimension=1)
    onehot = (class_ids == tgt).astype(jnp.float32)            # (TM, C)

    logpt = jnp.sum(logp * onehot, axis=-1, keepdims=True)     # (TM, 1)
    pt = jnp.exp(logpt)
    at = jnp.sum(alpha * onehot, axis=-1, keepdims=True)       # (TM, 1)
    logpt = logpt * at

    g = float(gamma)
    if g == 0.0:
        focal_w = jnp.ones_like(pt)
    elif g == int(g) and g > 0:
        focal_w = jax.lax.integer_pow(1.0 - pt, int(g))
    else:
        focal_w = jnp.power(jnp.maximum(1.0 - pt, 0.0), g)

    loss = -focal_w * logpt                                    # (TM, 1)

    # Mask out rows that were added by padding to a multiple of the tile size.
    tm = x.shape[0]
    row_ids = step * tm + jax.lax.broadcasted_iota(jnp.int32, (tm, 1), 0)
    valid = (row_ids < n_valid).astype(jnp.float32)

    acc_ref[...] += jnp.sum(loss * valid, axis=(0, 1), keepdims=True)

    @pl.when(step == pl.num_programs(0) - 1)
    def _finalize():
        denom = jnp.float32(n_valid) if size_average else jnp.float32(1.0)
        out_ref[...] = (acc_ref[...] / denom).astype(out_ref.dtype)


def focal_loss_pallas(logits, target, alpha=None, gamma=0.0, size_average=True,
                      block_rows=128):
    """Focal loss. logits: (N, C) or (N, C, *spatial); target: matching int labels."""
    logits = jnp.asarray(logits)
    target = jnp.asarray(target)

    if logits.ndim > 2:
        n, c = logits.shape[0], logits.shape[1]
        x = logits.reshape(n, c, -1)          # (N, C, S)
        x = jnp.transpose(x, (0, 2, 1))       # (N, S, C)
        x = x.reshape(-1, c)                  # (M, C)
    else:
        x = logits
        c = logits.shape[1]

    tgt = target.reshape(-1).astype(jnp.int32)
    m = x.shape[0]

    if alpha is None:
        alpha_row = jnp.ones((1, c), jnp.float32)
    else:
        a = jnp.asarray(alpha, jnp.float32).reshape(-1)
        if a.shape[0] < c:
            raise ValueError("alpha must provide a weight for every class")
        alpha_row = a[:c].reshape(1, c)

    # Row tile: multiple of 8 sublanes; whole class dim stays in one lane block.
    tm = min(int(block_rows), max(8, m))
    tm = ((tm + 7) // 8) * 8
    num_tiles = -(-m // tm)
    m_pad = num_tiles * tm
    if m_pad != m:
        x = jnp.pad(x, ((0, m_pad - m), (0, 0)))
        tgt = jnp.pad(tgt, (0, m_pad - m))
    tgt2d = tgt.reshape(m_pad, 1)

    kernel = partial(_focal_loss_kernel, gamma=float(gamma), n_valid=m,
                     size_average=bool(size_average))

    out = pl.pallas_call(
        kernel,
        out_shape=jax.ShapeDtypeStruct((1, 1), jnp.float32),
        grid_spec=pltpu.PrefetchScalarGridSpec(
            num_scalar_prefetch=0,
            grid=(num_tiles,),
            in_specs=[
                pl.BlockSpec((tm, c), lambda i: (i, 0)),   # logits row tile
                pl.BlockSpec((tm, 1), lambda i: (i, 0)),   # target row tile
                pl.BlockSpec((1, c), lambda i: (0, 0)),    # alpha row (reused)
            ],
            out_specs=pl.BlockSpec((1, 1), lambda i: (0, 0)),
            scratch_shapes=[pltpu.VMEM((1, 1), jnp.float32)],
        ),
        compiler_params=pltpu.CompilerParams(
            dimension_semantics=("arbitrary",)),   # reduction axis
    )(x, tgt2d, alpha_row)

    return out[0, 0]


class FocalLossPallas:
    """Mirror of the PyTorch FocalLoss module (forward only)."""

    def __init__(self, gamma=0, alpha=None, size_average=True):
        self.gamma = float(gamma)
        if isinstance(alpha, (float, int)) and not isinstance(alpha, bool):
            alpha = jnp.array([alpha, 1.0 - alpha], jnp.float32)
        elif isinstance(alpha, (list, tuple)):
            alpha = jnp.array(alpha, jnp.float32)
        self.alpha = alpha
        self.size_average = size_average

    def __call__(self, input, target):
        return focal_loss_pallas(input, target, self.alpha, self.gamma,
                                 self.size_average)


def _focal_loss_ref(logits, target, alpha_vec, gamma, size_average):
    """Pure-JAX reference matching the PyTorch forward."""
    if logits.ndim > 2:
        n, c = logits.shape[0], logits.shape[1]
        x = jnp.transpose(logits.reshape(n, c, -1), (0, 2, 1)).reshape(-1, c)
    else:
        x = logits
    t = target.reshape(-1).astype(jnp.int32)
    logp = jax.nn.log_softmax(x.astype(jnp.float32), axis=-1)
    logpt = jnp.take_along_axis(logp, t[:, None], axis=1)[:, 0]
    pt = jnp.exp(logpt)
    if alpha_vec is not None:
        logpt = logpt * alpha_vec[t]
    loss = -((1.0 - pt) ** gamma) * logpt
    return loss.mean() if size_average else loss.sum()


if __name__ == "__main__":
    key = jax.random.PRNGKey(0)
    k_x, k_t = jax.random.split(key)

    N, C, H, W = 2, 4, 16, 16
    logits = jax.random.normal(k_x, (N, C, H, W), jnp.float32)
    target = jax.random.randint(k_t, (N, H, W), 0, C, jnp.int32)

    # Case 1: gamma=2, per-class alpha, mean over samples.
    alpha = [0.75, 1.0, 1.25, 1.5]
    fl = FocalLossPallas(gamma=2.0, alpha=alpha, size_average=True)
    loss = jax.block_until_ready(fl(logits, target))
    ref = _focal_loss_ref(logits, target, jnp.array(alpha, jnp.float32), 2.0, True)
    assert loss.shape == ()
    assert jnp.allclose(loss, ref, rtol=1e-5, atol=1e-5), (loss, ref)

    # Case 2: gamma=0 (plain NLL), no alpha, sum reduction.
    fl2 = FocalLossPallas(gamma=0, alpha=None, size_average=False)
    loss2 = jax.block_until_ready(fl2(logits, target))
    ref2 = _focal_loss_ref(logits, target, None, 0.0, False)
    assert jnp.allclose(loss2, ref2, rtol=1e-5, atol=1e-4), (loss2, ref2)

    print("KERNEL_OK")
</pallas_src>

<mosaic_0001>
module attributes {stable_mosaic.version = 11 : i64} {
  func.func @_focal_loss_kernel(%arg0: i32, %arg1: memref<128x4xf32, #tpu.memory_space<vmem>>, %arg2: memref<128x1xi32, #tpu.memory_space<vmem>>, %arg3: memref<1x4xf32, #tpu.memory_space<vmem>>, %arg4: memref<1x1xf32, #tpu.memory_space<vmem>>, %arg5: memref<1x1xf32, #tpu.memory_space<vmem>>) attributes {dimension_semantics = [#tpu.dimension_semantics<arbitrary>], iteration_bounds = array<i64: 4>, scalar_prefetch = 0 : i64, scratch_operands = 1 : i64, tpu.core_type = #tpu.core_type<tc>, window_params = [{transform_indices = @transform_0, window_bounds = array<i64: 128, 4>}, {transform_indices = @transform_1, window_bounds = array<i64: 128, 1>}, {pipeline_mode = #tpu.pipeline_mode<synchronous>, transform_indices = @transform_2, window_bounds = array<i64: 1, 4>}, {pipeline_mode = #tpu.pipeline_mode<synchronous>, transform_indices = @transform_3, window_bounds = array<i64: 1, 1>}]} {
    %c0_i32 = arith.constant 0 : i32
    %0 = arith.cmpi eq, %arg0, %c0_i32 : i32
    %1 = arith.extui %0 : i1 to i32
    %c0_i32_0 = arith.constant 0 : i32
    %2 = arith.cmpi ne, %1, %c0_i32_0 : i32
    scf.if %2 {
      %cst_17 = arith.constant 0.000000e+00 : f32
      %56 = vector.broadcast %cst_17 : f32 to vector<1x1xf32>
      %c0_18 = arith.constant 0 : index
      %c0_19 = arith.constant 0 : index
      %57 = vector.load %arg5[%c0_18, %c0_19] : memref<1x1xf32, #tpu.memory_space<vmem>>, vector<1x1xf32>
      tpu.vector_store %arg5[%c0_18, %c0_19], %56 {strides = array<i32>} : memref<1x1xf32, #tpu.memory_space<vmem>>, vector<1x1xf32>,
    } else {
    }
    %c0 = arith.constant 0 : index
    %c0_1 = arith.constant 0 : index
    %3 = vector.load %arg1[%c0, %c0_1] : memref<128x4xf32, #tpu.memory_space<vmem>>, vector<128x4xf32>
    %c0_2 = arith.constant 0 : index
    %c0_3 = arith.constant 0 : index
    %4 = vector.load %arg2[%c0_2, %c0_3] : memref<128x1xi32, #tpu.memory_space<vmem>>, vector<128x1xi32>
    %c0_4 = arith.constant 0 : index
    %c0_5 = arith.constant 0 : index
    %5 = vector.load %arg3[%c0_4, %c0_5] : memref<1x4xf32, #tpu.memory_space<vmem>>, vector<1x4xf32>
    %cst = arith.constant dense<0xFF800000> : vector<128xf32>
    %6 = vector.multi_reduction <maximumf>, %3, %cst [1] : vector<128x4xf32> to vector<128xf32>
    %7 = vector.shape_cast %6 : vector<128xf32> to vector<128x1xf32>
    %8 = vector.broadcast %7 : vector<128x1xf32> to vector<128x4xf32>
    %9 = arith.subf %3, %8 : vector<128x4xf32>
    %10 = math.exp %9 : vector<128x4xf32>
    %cst_6 = arith.constant dense<0.000000e+00> : vector<128xf32>
    %11 = vector.multi_reduction <add>, %10, %cst_6 [1] : vector<128x4xf32> to vector<128xf32>
    %12 = vector.shape_cast %11 : vector<128xf32> to vector<128x1xf32>
    %13 = math.log %12 : vector<128x1xf32>
    %14 = vector.broadcast %13 : vector<128x1xf32> to vector<128x4xf32>
    %15 = arith.subf %9, %14 : vector<128x4xf32>
    %16 = tpu.iota {dimensions = array<i32: 1>} : vector<128x4xi32>
    %17 = vector.broadcast %4 : vector<128x1xi32> to vector<128x4xi32>
    %18 = arith.cmpi eq, %16, %17 : vector<128x4xi32>
    %19 = arith.extui %18 : vector<128x4xi1> to vector<128x4xi32>
    %20 = arith.sitofp %19 : vector<128x4xi32> to vector<128x4xf32>
    %21 = arith.mulf %15, %20 : vector<128x4xf32>
    %cst_7 = arith.constant dense<0.000000e+00> : vector<128xf32>
    %22 = vector.multi_reduction <add>, %21, %cst_7 [1] : vector<128x4xf32> to vector<128xf32>
    %23 = vector.shape_cast %22 : vector<128xf32> to vector<128x1xf32>
    %24 = math.exp %23 : vector<128x1xf32>
    %25 = vector.broadcast %5 : vector<1x4xf32> to vector<128x4xf32>
    %26 = arith.mulf %25, %20 : vector<128x4xf32>
    %cst_8 = arith.constant dense<0.000000e+00> : vector<128xf32>
    %27 = vector.multi_reduction <add>, %26, %cst_8 [1] : vector<128x4xf32> to vector<128xf32>
    %28 = vector.shape_cast %27 : vector<128xf32> to vector<128x1xf32>
    %29 = arith.mulf %23, %28 : vector<128x1xf32>
    %cst_9 = arith.constant 1.000000e+00 : f32
    %30 = vector.broadcast %cst_9 : f32 to vector<128x1xf32>
    %31 = arith.subf %30, %24 : vector<128x1xf32>
    %32 = arith.mulf %31, %31 : vector<128x1xf32>
    %cst_10 = arith.constant 0.000000e+00 : f32
    %33 = vector.broadcast %cst_10 : f32 to vector<128x1xf32>
    %34 = arith.subf %33, %32 : vector<128x1xf32>
    %35 = arith.mulf %34, %29 : vector<128x1xf32>
    %c128_i32 = arith.constant 128 : i32
    %36 = arith.muli %arg0, %c128_i32 : i32
    %37 = tpu.iota {dimensions = array<i32: 0>} : vector<128x1xi32>
    %38 = vector.broadcast %36 : i32 to vector<128x1xi32>
    %39 = arith.addi %38, %37 : vector<128x1xi32>
    %c512_i32 = arith.constant 512 : i32
    %40 = vector.broadcast %c512_i32 : i32 to vector<128x1xi32>
    %41 = arith.cmpi slt, %39, %40 : vector<128x1xi32>
    %42 = arith.extui %41 : vector<128x1xi1> to vector<128x1xi32>
    %43 = arith.sitofp %42 : vector<128x1xi32> to vector<128x1xf32>
    %c0_11 = arith.constant 0 : index
    %c0_12 = arith.constant 0 : index
    %44 = vector.load %arg5[%c0_11, %c0_12] : memref<1x1xf32, #tpu.memory_space<vmem>>, vector<1x1xf32>
    %45 = arith.mulf %35, %43 : vector<128x1xf32>
    %46 = vector.shape_cast %45 : vector<128x1xf32> to vector<1x128x1xf32>
    %cst_13 = arith.constant dense<0.000000e+00> : vector<1xf32>
    %47 = vector.multi_reduction <add>, %46, %cst_13 [1, 2] : vector<1x128x1xf32> to vector<1xf32>
    %48 = vector.shape_cast %47 : vector<1xf32> to vector<1x1x1xf32>
    %49 = vector.extract %48[0, 0, 0] : f32 from vector<1x1x1xf32>
    %50 = vector.broadcast %49 : f32 to vector<1x1xf32>
    %51 = arith.addf %44, %50 : vector<1x1xf32>
    %c0_14 = arith.constant 0 : index
    %c0_15 = arith.constant 0 : index
    %52 = vector.load %arg5[%c0_14, %c0_15] : memref<1x1xf32, #tpu.memory_space<vmem>>, vector<1x1xf32>
    tpu.vector_store %arg5[%c0_14, %c0_15], %51 {strides = array<i32>} : memref<1x1xf32, #tpu.memory_space<vmem>>, vector<1x1xf32>,
    %c3_i32 = arith.constant 3 : i32
    %53 = arith.cmpi eq, %arg0, %c3_i32 : i32
    %54 = arith.extui %53 : i1 to i32
    %c0_i32_16 = arith.constant 0 : i32
    %55 = arith.cmpi ne, %54, %c0_i32_16 : i32
    scf.if %55 {
      %c0_17 = arith.constant 0 : index
      %c0_18 = arith.constant 0 : index
      %56 = vector.load %arg5[%c0_17, %c0_18] : memref<1x1xf32, #tpu.memory_space<vmem>>, vector<1x1xf32>
      %cst_19 = arith.constant 5.120000e+02 : f32
      %57 = vector.broadcast %cst_19 : f32 to vector<1x1xf32>
      %58 = arith.divf %56, %57 : vector<1x1xf32>
      %c0_20 = arith.constant 0 : index
      %c0_21 = arith.constant 0 : index
      %59 = vector.load %arg4[%c0_20, %c0_21] : memref<1x1xf32, #tpu.memory_space<vmem>>, vector<1x1xf32>
      tpu.vector_store %arg4[%c0_20, %c0_21], %58 {strides = array<i32>} : memref<1x1xf32, #tpu.memory_space<vmem>>, vector<1x1xf32>,
    } else {
    }
    return
  }
  func.func @transform_0(%arg0: i32) -> (i32, i32) {
    %c0_i32 = arith.constant 0 : i32
    %c0_i32_0 = arith.constant 0 : i32
    return %arg0, %c0_i32 : i32, i32
  }
  func.func @transform_1(%arg0: i32) -> (i32, i32) {
    %c0_i32 = arith.constant 0 : i32
    %c0_i32_0 = arith.constant 0 : i32
    return %arg0, %c0_i32 : i32, i32
  }
  func.func @transform_2(%arg0: i32) -> (i32, i32) {
    %c0_i32 = arith.constant 0 : i32
    %c0_i32_0 = arith.constant 0 : i32
    %c0_i32_1 = arith.constant 0 : i32
    return %c0_i32, %c0_i32_0 : i32, i32
  }
  func.func @transform_3(%arg0: i32) -> (i32, i32) {
    %c0_i32 = arith.constant 0 : i32
    %c0_i32_0 = arith.constant 0 : i32
    %c0_i32_1 = arith.constant 0 : i32
    return %c0_i32, %c0_i32_0 : i32, i32
  }
}

</mosaic_0001>

<llo_original>
// kernel: tpu_custom_call.1
$region0: #{tpu_custom_call.1}
  #allocation0 [shape = 'u32[]', space=smem, size = 0x4, offset = 0x4, fixed_abs, tag = 'smem constant byte address 0x4 - core index']
  #allocation1 [shape = 'u32[72,128]{1,0:T(1,128)}', space=vmem, size = 0x9000, scoped, tag = 'internal scratch']
  #allocation2 [shape = 'f32[1,1]{1,0:T(1,128)}', space=vmem, size = 0x200, scoped, tag = 'scratch operand']
  %s0 = inlined_call_operand.vmem [shape: f32[512,4], index: 0, kind: input, shape index: {}]
  %s1 = inlined_call_operand.vmem [shape: s32[512,1], index: 1, kind: input, shape index: {}]
  %s2 = inlined_call_operand.vmem [shape: f32[1,4], index: 2, kind: input, shape index: {}]
  %s3 = inlined_call_operand.hbm [shape: f32[1,1], index: 3, kind: output, shape index: {}]
  %s4 = sld [smem:[#allocation0]]
  $region53: #{tpu_custom_call.1} parent=0
    _
  %s6 = ssub.s32 1, %s4
  %s7 = scalar_select 0, %s6, %s4
  $region1: #{tpu_custom_call.1} parent=0
    #allocation3 [shape = 'u8[512]{0}', space=vmem, size = 0x400, scoped, tag = 'output window, operand 0, single buffered']
    #allocation4 [shape = 's32[2]{0}', space=sflag, size = 0x8, scoped, tag = 'scoped memory for tpu_custom_call.1']
    %8 = vsyncpa [#allocation4], 0
    loop: start=0, step=1, limit=6
    $region2: #{tpu_custom_call.1} parent=1 // loop_pre_header
      _
    $region3: #{tpu_custom_call.1} parent=1 // loop_header
      %s10 = sphi 0, %s14
      %p11 = scmp.ge.s32.totalorder %s10, 6
      %s20 = sphi 0, %s22
      %s23 = sphi 0, %s20
      %s24 = sphi 0, %s23
      %s40 = sphi 0, %s24
      %s46 = sphi 0, %s48
      %s49 = sphi 0, %s46
      %s50 = sphi 0, %s49
      %s66 = sphi 0, %s50
      %s70 = sphi 0, %s70
      %s72 = sphi 0, %s70
      %s73 = sphi 0, %s72
      %s87 = sphi 0, %s73
      %s91 = sphi 0, %s91
      %s93 = sphi 0, %s91
      %s94 = sphi 0, %s93
      %s108 = sphi 0, %s94
    $region4: #{tpu_custom_call.1} parent=1 // loop_header_branch
      %13 = sbr.rel (%p11) target = $region8
    $region5: #{tpu_custom_call.1} parent=1 // loop_body
      %s15 = ssub.s32 %s10, 1
      %s16 = ssub.s32 %s10, 2
      %s17 = sadd.s32 %s10, 1
      %s18 = ssub.s32 %s10, %s17
      %p19 = scmp.eq.s32.totalorder %s18, 0
      %s21 = sadd.s32 %s20, 1
      %s22 = scalar_select %p19, %s20, %s21
      %p25 = pneg %p19
      %p26 = scmp.eq.s32.totalorder %s10, 3
      %p27 = por %p25, %p26
      %p28 = scmp.ne.s32.totalorder %s20, %s23
      %p29 = scmp.eq.s32.totalorder %s10, 0
      %p30 = por %p28, %p29
      %p31 = scmp.ne.s32.totalorder %s20, %s23
      %p32 = scmp.eq.s32.totalorder %s15, 3
      %p33 = por %p31, %p32
      %p34 = scmp.ne.s32.totalorder %s23, %s24
      %p35 = scmp.eq.s32.totalorder %s15, 0
      %p36 = por %p34, %p35
      %p37 = scmp.ne.s32.totalorder %s23, %s24
      %p38 = scmp.eq.s32.totalorder %s16, 3
      %p39 = por %p37, %p38
      %p41 = scmp.ne.s32.totalorder %s24, %s40
      %p42 = scmp.eq.s32.totalorder %s16, 0
      %p43 = por %p41, %p42
      %s44 = ssub.s32 %s10, %s17
      %p45 = scmp.eq.s32.totalorder %s44, 0
      %s47 = sadd.s32 %s46, 1
      %s48 = scalar_select %p45, %s46, %s47
      %p51 = pneg %p45
      %p52 = scmp.eq.s32.totalorder %s10, 3
      %p53 = por %p51, %p52
      %p54 = scmp.ne.s32.totalorder %s46, %s49
      %p55 = scmp.eq.s32.totalorder %s10, 0
      %p56 = por %p54, %p55
      %p57 = scmp.ne.s32.totalorder %s46, %s49
      %p58 = scmp.eq.s32.totalorder %s15, 3
      %p59 = por %p57, %p58
      %p60 = scmp.ne.s32.totalorder %s49, %s50
      %p61 = scmp.eq.s32.totalorder %s15, 0
      %p62 = por %p60, %p61
      %p63 = scmp.ne.s32.totalorder %s49, %s50
      %p64 = scmp.eq.s32.totalorder %s16, 3
      %p65 = por %p63, %p64
      %p67 = scmp.ne.s32.totalorder %s50, %s66
      %p68 = scmp.eq.s32.totalorder %s16, 0
      %p69 = por %p67, %p68
      %s71 = sadd.s32 %s70, 1
      %p74 = scmp.eq.s32.totalorder %s10, 3
      %p75 = scmp.ne.s32.totalorder %s70, %s72
      %p76 = scmp.eq.s32.totalorder %s10, 0
      %p77 = por %p75, %p76
      %p78 = scmp.ne.s32.totalorder %s70, %s72
      %p79 = scmp.eq.s32.totalorder %s15, 3
      %p80 = por %p78, %p79
      %p81 = scmp.ne.s32.totalorder %s72, %s73
      %p82 = scmp.eq.s32.totalorder %s15, 0
      %p83 = por %p81, %p82
      %p84 = scmp.ne.s32.totalorder %s72, %s73
      %p85 = scmp.eq.s32.totalorder %s16, 3
      %p86 = por %p84, %p85
      %p88 = scmp.ne.s32.totalorder %s73, %s87
      %p89 = scmp.eq.s32.totalorder %s16, 0
      %p90 = por %p88, %p89
      %s92 = sadd.s32 %s91, 1
      %p95 = scmp.eq.s32.totalorder %s10, 3
      %p96 = scmp.ne.s32.totalorder %s91, %s93
      %p97 = scmp.eq.s32.totalorder %s10, 0
      %p98 = por %p96, %p97
      %p99 = scmp.ne.s32.totalorder %s91, %s93
      %p100 = scmp.eq.s32.totalorder %s15, 3
      %p101 = por %p99, %p100
      %p102 = scmp.ne.s32.totalorder %s93, %s94
      %p103 = scmp.eq.s32.totalorder %s15, 0
      %p104 = por %p102, %p103
      %p105 = scmp.ne.s32.totalorder %s93, %s94
      %p106 = scmp.eq.s32.totalorder %s16, 3
      %p107 = por %p105, %p106
      %p109 = scmp.ne.s32.totalorder %s94, %s108
      %p110 = scmp.eq.s32.totalorder %s16, 0
      %p111 = por %p109, %p110
      %p112 = scmp.le.s32.totalorder 1, %s10
      %p113 = scmp.lt.s32.totalorder %s10, 5
      %p114 = pnand %p112, %p113
      %p115 = pneg %p114
      // Predicated region
      $region9: #{tpu_custom_call.1} parent=5 // pred_check
        _
      $region10: #{tpu_custom_call.1} parent=5 // pred_check_branch
        %117 = sbr.rel (%p114) target = $region12
      $region11: #{tpu_custom_call.1} parent=5 // pred_region
        %s118 = ssub.s32 %s10, 1
        // Predicated region
        $region13: #{tpu_custom_call.1} parent=11 // pred_check
          %p119 = pneg %p83
        $region14: #{tpu_custom_call.1} parent=11 // pred_check_branch
          %121 = sbr.rel (%p119) target = $region16
        $region15: #{tpu_custom_call.1} parent=11 // pred_region
          _
        $region16: #{tpu_custom_call.1} parent=11 // pred_fallthru
          _
      $region12: #{tpu_custom_call.1} parent=5 // pred_fallthru
        _
      %p122 = scmp.lt.s32.totalorder %s10, 4
      // Predicated region
      $region17: #{tpu_custom_call.1} parent=5 // pred_check
        %p123 = pneg %p122
      $region18: #{tpu_custom_call.1} parent=5 // pred_check_branch
        %125 = sbr.rel (%p123) target = $region20
      $region19: #{tpu_custom_call.1} parent=5 // pred_region
        // Predicated region
        $region21: #{tpu_custom_call.1} parent=19 // pred_check
          %p126 = pneg %p30
        $region22: #{tpu_custom_call.1} parent=19 // pred_check_branch
          %128 = sbr.rel (%p126) target = $region24
        $region23: #{tpu_custom_call.1} parent=19 // pred_region
          %s129 = smul.u32 16, %s10
          %p130 = scmp.lt.s32.totalorder %s129, 63
          %s131 = scalar_select %p130, %s129, 63
          %s132 = smul.addr %s131, 8
          %s133 = scalar_lea.vmem %s0, %s132
          %s134 = smul.u32 16, %s10
        $region24: #{tpu_custom_call.1} parent=19 // pred_fallthru
          _
        // Predicated region
        $region25: #{tpu_custom_call.1} parent=19 // pred_check
          %p135 = pneg %p56
        $region26: #{tpu_custom_call.1} parent=19 // pred_check_branch
          %137 = sbr.rel (%p135) target = $region28
        $region27: #{tpu_custom_call.1} parent=19 // pred_region
          %s138 = smul.u32 16, %s10
          %p139 = scmp.lt.s32.totalorder %s138, 63
          %s140 = scalar_select %p139, %s138, 63
          %s141 = smul.addr %s140, 8
          %s142 = scalar_lea.vmem %s1, %s141
          %s143 = smul.u32 16, %s10
        $region28: #{tpu_custom_call.1} parent=19 // pred_fallthru
          _
      $region20: #{tpu_custom_call.1} parent=5 // pred_fallthru
        _
      %p144 = scmp.le.s32.totalorder 1, %s10
      %p145 = scmp.lt.s32.totalorder %s10, 5
      %p146 = pnand %p144, %p145
      %p147 = pneg %p146
      // Predicated region
      $region29: #{tpu_custom_call.1} parent=5 // pred_check
        _
      $region30: #{tpu_custom_call.1} parent=5 // pred_check_branch
        %149 = sbr.rel (%p146) target = $region32
      $region31: #{tpu_custom_call.1} parent=5 // pred_region
        %s150 = ssub.s32 %s10, 1
        %s151 = smul.u32 16, %s15
        %p152 = scmp.lt.s32.totalorder %s151, 63
        %s153 = scalar_select %p152, %s151, 63
        %s154 = smul.addr %s153, 8
        %s155 = scalar_lea.vmem %s0, %s154
        %p156 = pneg %p36
        %p157 = pneg %p33
        %s158 = smul.u32 16, %s15
        %p159 = scmp.lt.s32.totalorder %s158, 63
        %s160 = scalar_select %p159, %s158, 63
        %s161 = smul.addr %s160, 8
        %s162 = scalar_lea.vmem %s1, %s161
        %p163 = pneg %p62
        %p164 = pneg %p59
        %p165 = pneg %p83
        %p166 = pneg %p80
        %p167 = pneg %p104
        %p168 = pneg %p101
        %s169 = smul.u32 16, %s15
        %p170 = scmp.lt.s32.totalorder %s169, 63
        %s171 = scalar_select %p170, %s169, 63
        %s172 = smul.addr %s171, 8
        %s173 = scalar_lea.vmem %s0, %s172
        %s174 = smul.u32 16, %s15
        %s175 = smul.u32 16, %s15
        %p176 = scmp.lt.s32.totalorder %s175, 63
        %s177 = scalar_select %p176, %s175, 63
        %s178 = smul.addr %s177, 8
        %s179 = scalar_lea.vmem %s1, %s178
        %s180 = smul.u32 16, %s15
        %p181 = scmp.eq.s32.totalorder %s15, 0
        // Predicated region
        $region33: #{tpu_custom_call.1} parent=31 // pred_check
          %p182 = pneg %p181
        $region34: #{tpu_custom_call.1} parent=31 // pred_check_branch
          %184 = sbr.rel (%p182) target = $region36
        $region35: #{tpu_custom_call.1} parent=31 // pred_region
          %vm185 = vcmask 0
          %186 = vst.msk [vmem:[#allocation2] sm:$0x1] %vm185, 0.0
        $region36: #{tpu_custom_call.1} parent=31 // pred_fallthru
          _
        %v187 = vld [vmem:[%s173] sm:$0xff]
        %v188 = vld [vmem:[%s173 + $0x8] sm:$0xff]
        %v189 = vld [vmem:[%s173 + $0x10] sm:$0xff]
        %v190 = vld [vmem:[%s173 + $0x18] sm:$0xff]
        %v191 = vld [vmem:[%s173 + $0x20] sm:$0xff]
        %v192 = vld [vmem:[%s173 + $0x28] sm:$0xff]
        %v193 = vld [vmem:[%s173 + $0x30] sm:$0xff]
        %v194 = vld [vmem:[%s173 + $0x38] sm:$0xff]
        %v195 = vld [vmem:[%s173 + $0x40] sm:$0xff]
        %v196 = vld [vmem:[%s173 + $0x48] sm:$0xff]
        %v197 = vld [vmem:[%s173 + $0x50] sm:$0xff]
        %v198 = vld [vmem:[%s173 + $0x58] sm:$0xff]
        %v199 = vld [vmem:[%s173 + $0x60] sm:$0xff]
        %v200 = vld [vmem:[%s173 + $0x68] sm:$0xff]
        %v201 = vld [vmem:[%s173 + $0x70] sm:$0xff]
        %v202 = vld [vmem:[%s173 + $0x78] sm:$0xff]
        %v203 = vld [vmem:[%s179] sm:$0xff]
        %v204 = vld [vmem:[%s179 + $0x8] sm:$0xff]
        %v205 = vld [vmem:[%s179 + $0x10] sm:$0xff]
        %v206 = vld [vmem:[%s179 + $0x18] sm:$0xff]
        %v207 = vld [vmem:[%s179 + $0x20] sm:$0xff]
        %v208 = vld [vmem:[%s179 + $0x28] sm:$0xff]
        %v209 = vld [vmem:[%s179 + $0x30] sm:$0xff]
        %v210 = vld [vmem:[%s179 + $0x38] sm:$0xff]
        %v211 = vld [vmem:[%s179 + $0x40] sm:$0xff]
        %v212 = vld [vmem:[%s179 + $0x48] sm:$0xff]
        %v213 = vld [vmem:[%s179 + $0x50] sm:$0xff]
        %v214 = vld [vmem:[%s179 + $0x58] sm:$0xff]
        %v215 = vld [vmem:[%s179 + $0x60] sm:$0xff]
        %v216 = vld [vmem:[%s179 + $0x68] sm:$0xff]
        %v217 = vld [vmem:[%s179 + $0x70] sm:$0xff]
        %v218 = vld [vmem:[%s179 + $0x78] sm:$0xff]
        %v219 = vld [vmem:[%s2] sm:$0x1]
        %vm220 = vcmask 31744
        %v221 = vsel %vm220, %v187, -inf
        %222 = vmax.xlane.f32.xlu0 %v221
        %v223 = vpop.xlane.xlu0 %222
        %v224 = vsel %vm220, %v188, -inf
        %225 = vmax.xlane.f32.xlu0 %v224
        %v226 = vpop.xlane.xlu0 %225
        %v227 = vsel %vm220, %v189, -inf
        %228 = vmax.xlane.f32.xlu0 %v227
        %v229 = vpop.xlane.xlu0 %228
        %v230 = vsel %vm220, %v190, -inf
        %231 = vmax.xlane.f32.xlu0 %v230
        %v232 = vpop.xlane.xlu0 %231
        %v233 = vsel %vm220, %v191, -inf
        %234 = vmax.xlane.f32.xlu0 %v233
        %v235 = vpop.xlane.xlu0 %234
        %v236 = vsel %vm220, %v192, -inf
        %237 = vmax.xlane.f32.xlu0 %v236
        %v238 = vpop.xlane.xlu0 %237
        %v239 = vsel %vm220, %v193, -inf
        %240 = vmax.xlane.f32.xlu0 %v239
        %v241 = vpop.xlane.xlu0 %240
        %v242 = vsel %vm220, %v194, -inf
        %243 = vmax.xlane.f32.xlu0 %v242
        %v244 = vpop.xlane.xlu0 %243
        %v245 = vsel %vm220, %v195, -inf
        %246 = vmax.xlane.f32.xlu0 %v245
        %v247 = vpop.xlane.xlu0 %246
        %v248 = vsel %vm220, %v196, -inf
        %249 = vmax.xlane.f32.xlu0 %v248
        %v250 = vpop.xlane.xlu0 %249
        %v251 = vsel %vm220, %v197, -inf
        %252 = vmax.xlane.f32.xlu0 %v251
        %v253 = vpop.xlane.xlu0 %252
        %v254 = vsel %vm220, %v198, -inf
        %255 = vmax.xlane.f32.xlu0 %v254
        %v256 = vpop.xlane.xlu0 %255
        %v257 = vsel %vm220, %v199, -inf
        %258 = vmax.xlane.f32.xlu0 %v257
        %v259 = vpop.xlane.xlu0 %258
        %v260 = vsel %vm220, %v200, -inf
        %261 = vmax.xlane.f32.xlu0 %v260
        %v262 = vpop.xlane.xlu0 %261
        %v263 = vsel %vm220, %v201, -inf
        %264 = vmax.xlane.f32.xlu0 %v263
        %v265 = vpop.xlane.xlu0 %264
        %v266 = vsel %vm220, %v202, -inf
        %267 = vmax.xlane.f32.xlu0 %v266
        %v268 = vpop.xlane.xlu0 %267
        %v269 = vsub.f32 %v187, %v223
        %v270 = vsub.f32 %v188, %v226
        %v271 = vsub.f32 %v189, %v229
        %v272 = vsub.f32 %v190, %v232
        %v273 = vsub.f32 %v191, %v235
        %v274 = vsub.f32 %v192, %v238
        %v275 = vsub.f32 %v193, %v241
        %v276 = vsub.f32 %v194, %v244
        %v277 = vsub.f32 %v195, %v247
        %v278 = vsub.f32 %v196, %v250
        %v279 = vsub.f32 %v197, %v253
        %v280 = vsub.f32 %v198, %v256
        %v281 = vsub.f32 %v199, %v259
        %v282 = vsub.f32 %v200, %v262
        %v283 = vsub.f32 %v201, %v265
        %v284 = vsub.f32 %v202, %v268
        %v285 = vmul.f32 %v269, 1.442695
        %v286 = vpow.pop %v285
        %v287 = vmul.f32 %v270, 1.442695
        %v288 = vpow.pop %v287
        %v289 = vmul.f32 %v271, 1.442695
        %v290 = vpow.pop %v289
        %v291 = vmul.f32 %v272, 1.442695
        %v292 = vpow.pop %v291
        %v293 = vmul.f32 %v273, 1.442695
        %v294 = vpow.pop %v293
        %v295 = vmul.f32 %v274, 1.442695
        %v296 = vpow.pop %v295
        %v297 = vmul.f32 %v275, 1.442695
        %v298 = vpow.pop %v297
        %v299 = vmul.f32 %v276, 1.442695
        %v300 = vpow.pop %v299
        %v301 = vmul.f32 %v277, 1.442695
        %v302 = vpow.pop %v301
        %v303 = vmul.f32 %v278, 1.442695
        %v304 = vpow.pop %v303
        %v305 = vmul.f32 %v279, 1.442695
        %v306 = vpow.pop %v305
        %v307 = vmul.f32 %v280, 1.442695
        %v308 = vpow.pop %v307
        %v309 = vmul.f32 %v281, 1.442695
        %v310 = vpow.pop %v309
        %v311 = vmul.f32 %v282, 1.442695
        %v312 = vpow.pop %v311
        %v313 = vmul.f32 %v283, 1.442695
        %v314 = vpow.pop %v313
        %v315 = vmul.f32 %v284, 1.442695
        %v316 = vpow.pop %v315
        %v317 = vsel %vm220, %v286, 0.0
        %318 = vadd.xlane.f32.xlu0 %v317
        %v319 = vpop.xlane.xlu0 %318
        %v320 = vsel %vm220, %v288, 0.0
        %321 = vadd.xlane.f32.xlu0 %v320
        %v322 = vpop.xlane.xlu0 %321
        %v323 = vsel %vm220, %v290, 0.0
        %324 = vadd.xlane.f32.xlu0 %v323
        %v325 = vpop.xlane.xlu0 %324
        %v326 = vsel %vm220, %v292, 0.0
        %327 = vadd.xlane.f32.xlu0 %v326
        %v328 = vpop.xlane.xlu0 %327
        %v329 = vsel %vm220, %v294, 0.0
        %330 = vadd.xlane.f32.xlu0 %v329
        %v331 = vpop.xlane.xlu0 %330
        %v332 = vsel %vm220, %v296, 0.0
        %333 = vadd.xlane.f32.xlu0 %v332
        %v334 = vpop.xlane.xlu0 %333
        %v335 = vsel %vm220, %v298, 0.0
        %336 = vadd.xlane.f32.xlu0 %v335
        %v337 = vpop.xlane.xlu0 %336
        %v338 = vsel %vm220, %v300, 0.0
        %339 = vadd.xlane.f32.xlu0 %v338
        %v340 = vpop.xlane.xlu0 %339
        %v341 = vsel %vm220, %v302, 0.0
        %342 = vadd.xlane.f32.xlu0 %v341
        %v343 = vpop.xlane.xlu0 %342
        %v344 = vsel %vm220, %v304, 0.0
        %345 = vadd.xlane.f32.xlu0 %v344
        %v346 = vpop.xlane.xlu0 %345
        %v347 = vsel %vm220, %v306, 0.0
        %348 = vadd.xlane.f32.xlu0 %v347
        %v349 = vpop.xlane.xlu0 %348
        %v350 = vsel %vm220, %v308, 0.0
        %351 = vadd.xlane.f32.xlu0 %v350
        %v352 = vpop.xlane.xlu0 %351
        %v353 = vsel %vm220, %v310, 0.0
        %354 = vadd.xlane.f32.xlu0 %v353
        %v355 = vpop.xlane.xlu0 %354
        %v356 = vsel %vm220, %v312, 0.0
        %357 = vadd.xlane.f32.xlu0 %v356
        %v358 = vpop.xlane.xlu0 %357
        %v359 = vsel %vm220, %v314, 0.0
        %360 = vadd.xlane.f32.xlu0 %v359
        %v361 = vpop.xlane.xlu0 %360
        %v362 = vsel %vm220, %v316, 0.0
        %363 = vadd.xlane.f32.xlu0 %v362
        %v364 = vpop.xlane.xlu0 %363
        %v365 = vlog2.pop %v319
        %v366 = vmul.f32 %v365, 0.6931472
        %v367 = vlog2.pop %v322
        %v368 = vmul.f32 %v367, 0.6931472
        %v369 = vlog2.pop %v325
        %v370 = vmul.f32 %v369, 0.6931472
        %v371 = vlog2.pop %v328
        %v372 = vmul.f32 %v371, 0.6931472
        %v373 = vlog2.pop %v331
        %v374 = vmul.f32 %v373, 0.6931472
        %v375 = vlog2.pop %v334
        %v376 = vmul.f32 %v375, 0.6931472
        %v377 = vlog2.pop %v337
        %v378 = vmul.f32 %v377, 0.6931472
        %v379 = vlog2.pop %v340
        %v380 = vmul.f32 %v379, 0.6931472
        %v381 = vlog2.pop %v343
        %v382 = vmul.f32 %v381, 0.6931472
        %v383 = vlog2.pop %v346
        %v384 = vmul.f32 %v383, 0.6931472
        %v385 = vlog2.pop %v349
        %v386 = vmul.f32 %v385, 0.6931472
        %v387 = vlog2.pop %v352
        %v388 = vmul.f32 %v387, 0.6931472
        %v389 = vlog2.pop %v355
        %v390 = vmul.f32 %v389, 0.6931472
        %v391 = vlog2.pop %v358
        %v392 = vmul.f32 %v391, 0.6931472
        %v393 = vlog2.pop %v361
        %v394 = vmul.f32 %v393, 0.6931472
        %v395 = vlog2.pop %v364
        %v396 = vmul.f32 %v395, 0.6931472
        %v397 = vsub.f32 %v269, %v366
        %v398 = vsub.f32 %v270, %v368
        %v399 = vsub.f32 %v271, %v370
        %v400 = vsub.f32 %v272, %v372
        %v401 = vsub.f32 %v273, %v374
        %v402 = vsub.f32 %v274, %v376
        %v403 = vsub.f32 %v275, %v378
        %v404 = vsub.f32 %v276, %v380
        %v405 = vsub.f32 %v277, %v382
        %v406 = vsub.f32 %v278, %v384
        %v407 = vsub.f32 %v279, %v386
        %v408 = vsub.f32 %v280, %v388
        %v409 = vsub.f32 %v281, %v390
        %v410 = vsub.f32 %v282, %v392
        %v411 = vsub.f32 %v283, %v394
        %v412 = vsub.f32 %v284, %v396
        %v413 = vlaneseq
        %v414 = vand.u32 %v413, 127
        %415 = vset.pattern.permute.xlu0 0
        %416 = vperm.xlu0 %415, %v203
        %v417 = vpop.permute.xlu0 %416
        %418 = vset.pattern.permute.xlu0 0
        %419 = vperm.xlu0 %418, %v204
        %v420 = vpop.permute.xlu0 %419
        %421 = vset.pattern.permute.xlu0 0
        %422 = vperm.xlu0 %421, %v205
        %v423 = vpop.permute.xlu0 %422
        %424 = vset.pattern.permute.xlu0 0
        %425 = vperm.xlu0 %424, %v206
        %v426 = vpop.permute.xlu0 %425
        %427 = vset.pattern.permute.xlu0 0
        %428 = vperm.xlu0 %427, %v207
        %v429 = vpop.permute.xlu0 %428
        %430 = vset.pattern.permute.xlu0 0
        %431 = vperm.xlu0 %430, %v208
        %v432 = vpop.permute.xlu0 %431
        %433 = vset.pattern.permute.xlu0 0
        %434 = vperm.xlu0 %433, %v209
        %v435 = vpop.permute.xlu0 %434
        %436 = vset.pattern.permute.xlu0 0
        %437 = vperm.xlu0 %436, %v210
        %v438 = vpop.permute.xlu0 %437
        %439 = vset.pattern.permute.xlu0 0
        %440 = vperm.xlu0 %439, %v211
        %v441 = vpop.permute.xlu0 %440
        %442 = vset.pattern.permute.xlu0 0
        %443 = vperm.xlu0 %442, %v212
        %v444 = vpop.permute.xlu0 %443
        %445 = vset.pattern.permute.xlu0 0
        %446 = vperm.xlu0 %445, %v213
        %v447 = vpop.permute.xlu0 %446
        %448 = vset.pattern.permute.xlu0 0
        %449 = vperm.xlu0 %448, %v214
        %v450 = vpop.permute.xlu0 %449
        %451 = vset.pattern.permute.xlu0 0
        %452 = vperm.xlu0 %451, %v215
        %v453 = vpop.permute.xlu0 %452
        %454 = vset.pattern.permute.xlu0 0
        %455 = vperm.xlu0 %454, %v216
        %v456 = vpop.permute.xlu0 %455
        %457 = vset.pattern.permute.xlu0 0
        %458 = vperm.xlu0 %457, %v217
        %v459 = vpop.permute.xlu0 %458
        %460 = vset.pattern.permute.xlu0 0
        %461 = vperm.xlu0 %460, %v218
        %v462 = vpop.permute.xlu0 %461
        %vm463 = vcmp.eq.s32.totalorder %v414, %v417
        %vm464 = vcmp.eq.s32.totalorder %v414, %v420
        %vm465 = vcmp.eq.s32.totalorder %v414, %v423
        %vm466 = vcmp.eq.s32.totalorder %v414, %v426
        %vm467 = vcmp.eq.s32.totalorder %v414, %v429
        %vm468 = vcmp.eq.s32.totalorder %v414, %v432
        %vm469 = vcmp.eq.s32.totalorder %v414, %v435
        %vm470 = vcmp.eq.s32.totalorder %v414, %v438
        %vm471 = vcmp.eq.s32.totalorder %v414, %v441
        %vm472 = vcmp.eq.s32.totalorder %v414, %v444
        %vm473 = vcmp.eq.s32.totalorder %v414, %v447
        %vm474 = vcmp.eq.s32.totalorder %v414, %v450
        %vm475 = vcmp.eq.s32.totalorder %v414, %v453
        %vm476 = vcmp.eq.s32.totalorder %v414, %v456
        %vm477 = vcmp.eq.s32.totalorder %v414, %v459
        %vm478 = vcmp.eq.s32.totalorder %v414, %v462
        %v479 = vsel %vm463, 1, 0
        %v480 = vsel %vm464, 1, 0
        %v481 = vsel %vm465, 1, 0
        %v482 = vsel %vm466, 1, 0
        %v483 = vsel %vm467, 1, 0
        %v484 = vsel %vm468, 1, 0
        %v485 = vsel %vm469, 1, 0
        %v486 = vsel %vm470, 1, 0
        %v487 = vsel %vm471, 1, 0
        %v488 = vsel %vm472, 1, 0
        %v489 = vsel %vm473, 1, 0
        %v490 = vsel %vm474, 1, 0
        %v491 = vsel %vm475, 1, 0
        %v492 = vsel %vm476, 1, 0
        %v493 = vsel %vm477, 1, 0
        %v494 = vsel %vm478, 1, 0
        %v495 = vcvt.s32.f32 %v479
        %v496 = vcvt.s32.f32 %v480
        %v497 = vcvt.s32.f32 %v481
        %v498 = vcvt.s32.f32 %v482
        %v499 = vcvt.s32.f32 %v483
        %v500 = vcvt.s32.f32 %v484
        %v501 = vcvt.s32.f32 %v485
        %v502 = vcvt.s32.f32 %v486
        %v503 = vcvt.s32.f32 %v487
        %v504 = vcvt.s32.f32 %v488
        %v505 = vcvt.s32.f32 %v489
        %v506 = vcvt.s32.f32 %v490
        %v507 = vcvt.s32.f32 %v491
        %v508 = vcvt.s32.f32 %v492
        %v509 = vcvt.s32.f32 %v493
        %v510 = vcvt.s32.f32 %v494
        %v511 = vmul.f32 %v397, %v495
        %v512 = vmul.f32 %v398, %v496
        %v513 = vmul.f32 %v399, %v497
        %v514 = vmul.f32 %v400, %v498
        %v515 = vmul.f32 %v401, %v499
        %v516 = vmul.f32 %v402, %v500
        %v517 = vmul.f32 %v403, %v501
        %v518 = vmul.f32 %v404, %v502
        %v519 = vmul.f32 %v405, %v503
        %v520 = vmul.f32 %v406, %v504
        %v521 = vmul.f32 %v407, %v505
        %v522 = vmul.f32 %v408, %v506
        %v523 = vmul.f32 %v409, %v507
        %v524 = vmul.f32 %v410, %v508
        %v525 = vmul.f32 %v411, %v509
        %v526 = vmul.f32 %v412, %v510
        %v527 = vsel %vm220, %v511, 0.0
        %528 = vadd.xlane.f32.xlu0 %v527
        %v529 = vpop.xlane.xlu0 %528
        %v530 = vsel %vm220, %v512, 0.0
        %531 = vadd.xlane.f32.xlu0 %v530
        %v532 = vpop.xlane.xlu0 %531
        %v533 = vsel %vm220, %v513, 0.0
        %534 = vadd.xlane.f32.xlu0 %v533
        %v535 = vpop.xlane.xlu0 %534
        %v536 = vsel %vm220, %v514, 0.0
        %537 = vadd.xlane.f32.xlu0 %v536
        %v538 = vpop.xlane.xlu0 %537
        %v539 = vsel %vm220, %v515, 0.0
        %540 = vadd.xlane.f32.xlu0 %v539
        %v541 = vpop.xlane.xlu0 %540
        %v542 = vsel %vm220, %v516, 0.0
        %543 = vadd.xlane.f32.xlu0 %v542
        %v544 = vpop.xlane.xlu0 %543
        %v545 = vsel %vm220, %v517, 0.0
        %546 = vadd.xlane.f32.xlu0 %v545
        %v547 = vpop.xlane.xlu0 %546
        %v548 = vsel %vm220, %v518, 0.0
        %549 = vadd.xlane.f32.xlu0 %v548
        %v550 = vpop.xlane.xlu0 %549
        %v551 = vsel %vm220, %v519, 0.0
        %552 = vadd.xlane.f32.xlu0 %v551
        %v553 = vpop.xlane.xlu0 %552
        %v554 = vsel %vm220, %v520, 0.0
        %555 = vadd.xlane.f32.xlu0 %v554
        %v556 = vpop.xlane.xlu0 %555
        %v557 = vsel %vm220, %v521, 0.0
        %558 = vadd.xlane.f32.xlu0 %v557
        %v559 = vpop.xlane.xlu0 %558
        %v560 = vsel %vm220, %v522, 0.0
        %561 = vadd.xlane.f32.xlu0 %v560
        %v562 = vpop.xlane.xlu0 %561
        %v563 = vsel %vm220, %v523, 0.0
        %564 = vadd.xlane.f32.xlu0 %v563
        %v565 = vpop.xlane.xlu0 %564
        %v566 = vsel %vm220, %v524, 0.0
        %567 = vadd.xlane.f32.xlu0 %v566
        %v568 = vpop.xlane.xlu0 %567
        %v569 = vsel %vm220, %v525, 0.0
        %570 = vadd.xlane.f32.xlu0 %v569
        %v571 = vpop.xlane.xlu0 %570
        %v572 = vsel %vm220, %v526, 0.0
        %573 = vadd.xlane.f32.xlu0 %v572
        %v574 = vpop.xlane.xlu0 %573
        %v575 = vmul.f32 %v529, 1.442695
        %v576 = vpow.pop %v575
        %v577 = vmul.f32 %v532, 1.442695
        %v578 = vpow.pop %v577
        %v579 = vmul.f32 %v535, 1.442695
        %v580 = vpow.pop %v579
        %v581 = vmul.f32 %v538, 1.442695
        %v582 = vpow.pop %v581
        %v583 = vmul.f32 %v541, 1.442695
        %v584 = vpow.pop %v583
        %v585 = vmul.f32 %v544, 1.442695
        %v586 = vpow.pop %v585
        %v587 = vmul.f32 %v547, 1.442695
        %v588 = vpow.pop %v587
        %v589 = vmul.f32 %v550, 1.442695
        %v590 = vpow.pop %v589
        %v591 = vmul.f32 %v553, 1.442695
        %v592 = vpow.pop %v591
        %v593 = vmul.f32 %v556, 1.442695
        %v594 = vpow.pop %v593
        %v595 = vmul.f32 %v559, 1.442695
        %v596 = vpow.pop %v595
        %v597 = vmul.f32 %v562, 1.442695
        %v598 = vpow.pop %v597
        %v599 = vmul.f32 %v565, 1.442695
        %v600 = vpow.pop %v599
        %v601 = vmul.f32 %v568, 1.442695
        %v602 = vpow.pop %v601
        %v603 = vmul.f32 %v571, 1.442695
        %v604 = vpow.pop %v603
        %v605 = vmul.f32 %v574, 1.442695
        %v606 = vpow.pop %v605
        %v608 = vperm.slane %v219, 0
        %v610 = vmul.f32 %v608, %v495
        %v611 = vmul.f32 %v608, %v496
        %v612 = vmul.f32 %v608, %v497
        %v613 = vmul.f32 %v608, %v498
        %v614 = vmul.f32 %v608, %v499
        %v615 = vmul.f32 %v608, %v500
        %v616 = vmul.f32 %v608, %v501
        %v617 = vmul.f32 %v608, %v502
        %v618 = vmul.f32 %v608, %v503
        %v619 = vmul.f32 %v608, %v504
        %v620 = vmul.f32 %v608, %v505
        %v621 = vmul.f32 %v608, %v506
        %v622 = vmul.f32 %v608, %v507
        %v623 = vmul.f32 %v608, %v508
        %v624 = vmul.f32 %v608, %v509
        %v625 = vmul.f32 %v608, %v510
        %v626 = vsel %vm220, %v610, 0.0
        %627 = vadd.xlane.f32.xlu0 %v626
        %v628 = vpop.xlane.xlu0 %627
        %v629 = vsel %vm220, %v611, 0.0
        %630 = vadd.xlane.f32.xlu0 %v629
        %v631 = vpop.xlane.xlu0 %630
        %v632 = vsel %vm220, %v612, 0.0
        %633 = vadd.xlane.f32.xlu0 %v632
        %v634 = vpop.xlane.xlu0 %633
        %v635 = vsel %vm220, %v613, 0.0
        %636 = vadd.xlane.f32.xlu0 %v635
        %v637 = vpop.xlane.xlu0 %636
        %v638 = vsel %vm220, %v614, 0.0
        %639 = vadd.xlane.f32.xlu0 %v638
        %v640 = vpop.xlane.xlu0 %639
        %v641 = vsel %vm220, %v615, 0.0
        %642 = vadd.xlane.f32.xlu0 %v641
        %v643 = vpop.xlane.xlu0 %642
        %v644 = vsel %vm220, %v616, 0.0
        %645 = vadd.xlane.f32.xlu0 %v644
        %v646 = vpop.xlane.xlu0 %645
        %v647 = vsel %vm220, %v617, 0.0
        %648 = vadd.xlane.f32.xlu0 %v647
        %v649 = vpop.xlane.xlu0 %648
        %v650 = vsel %vm220, %v618, 0.0
        %651 = vadd.xlane.f32.xlu0 %v650
        %v652 = vpop.xlane.xlu0 %651
        %v653 = vsel %vm220, %v619, 0.0
        %654 = vadd.xlane.f32.xlu0 %v653
        %v655 = vpop.xlane.xlu0 %654
        %v656 = vsel %vm220, %v620, 0.0
        %657 = vadd.xlane.f32.xlu0 %v656
        %v658 = vpop.xlane.xlu0 %657
        %v659 = vsel %vm220, %v621, 0.0
        %660 = vadd.xlane.f32.xlu0 %v659
        %v661 = vpop.xlane.xlu0 %660
        %v662 = vsel %vm220, %v622, 0.0
        %663 = vadd.xlane.f32.xlu0 %v662
        %v664 = vpop.xlane.xlu0 %663
        %v665 = vsel %vm220, %v623, 0.0
        %666 = vadd.xlane.f32.xlu0 %v665
        %v667 = vpop.xlane.xlu0 %666
        %v668 = vsel %vm220, %v624, 0.0
        %669 = vadd.xlane.f32.xlu0 %v668
        %v670 = vpop.xlane.xlu0 %669
        %v671 = vsel %vm220, %v625, 0.0
        %672 = vadd.xlane.f32.xlu0 %v671
        %v673 = vpop.xlane.xlu0 %672
        %v674 = vmul.f32 %v529, %v628
        %v675 = vmul.f32 %v532, %v631
        %v676 = vmul.f32 %v535, %v634
        %v677 = vmul.f32 %v538, %v637
        %v678 = vmul.f32 %v541, %v640
        %v679 = vmul.f32 %v544, %v643
        %v680 = vmul.f32 %v547, %v646
        %v681 = vmul.f32 %v550, %v649
        %v682 = vmul.f32 %v553, %v652
        %v683 = vmul.f32 %v556, %v655
        %v684 = vmul.f32 %v559, %v658
        %v685 = vmul.f32 %v562, %v661
        %v686 = vmul.f32 %v565, %v664
        %v687 = vmul.f32 %v568, %v667
        %v688 = vmul.f32 %v571, %v670
        %v689 = vmul.f32 %v574, %v673
        %v690 = vsub.f32 1.0, %v576
        %v691 = vsub.f32 1.0, %v578
        %v692 = vsub.f32 1.0, %v580
        %v693 = vsub.f32 1.0, %v582
        %v694 = vsub.f32 1.0, %v584
        %v695 = vsub.f32 1.0, %v586
        %v696 = vsub.f32 1.0, %v588
        %v697 = vsub.f32 1.0, %v590
        %v698 = vsub.f32 1.0, %v592
        %v699 = vsub.f32 1.0, %v594
        %v700 = vsub.f32 1.0, %v596
        %v701 = vsub.f32 1.0, %v598
        %v702 = vsub.f32 1.0, %v600
        %v703 = vsub.f32 1.0, %v602
        %v704 = vsub.f32 1.0, %v604
        %v705 = vsub.f32 1.0, %v606
        %v706 = vmul.f32 %v690, %v690
        %v707 = vmul.f32 %v691, %v691
        %v708 = vmul.f32 %v692, %v692
        %v709 = vmul.f32 %v693, %v693
        %v710 = vmul.f32 %v694, %v694
        %v711 = vmul.f32 %v695, %v695
        %v712 = vmul.f32 %v696, %v696
        %v713 = vmul.f32 %v697, %v697
        %v714 = vmul.f32 %v698, %v698
        %v715 = vmul.f32 %v699, %v699
        %v716 = vmul.f32 %v700, %v700
        %v717 = vmul.f32 %v701, %v701
        %v718 = vmul.f32 %v702, %v702
        %v719 = vmul.f32 %v703, %v703
        %v720 = vmul.f32 %v704, %v704
        %v721 = vmul.f32 %v705, %v705
        %v722 = vsub.f32 0.0, %v706
        %v723 = vsub.f32 0.0, %v707
        %v724 = vsub.f32 0.0, %v708
        %v725 = vsub.f32 0.0, %v709
        %v726 = vsub.f32 0.0, %v710
        %v727 = vsub.f32 0.0, %v711
        %v728 = vsub.f32 0.0, %v712
        %v729 = vsub.f32 0.0, %v713
        %v730 = vsub.f32 0.0, %v714
        %v731 = vsub.f32 0.0, %v715
        %v732 = vsub.f32 0.0, %v716
        %v733 = vsub.f32 0.0, %v717
        %v734 = vsub.f32 0.0, %v718
        %v735 = vsub.f32 0.0, %v719
        %v736 = vsub.f32 0.0, %v720
        %v737 = vsub.f32 0.0, %v721
        %v738 = vmul.f32 %v722, %v674
        %v739 = vmul.f32 %v723, %v675
        %v740 = vmul.f32 %v724, %v676
        %v741 = vmul.f32 %v725, %v677
        %v742 = vmul.f32 %v726, %v678
        %v743 = vmul.f32 %v727, %v679
        %v744 = vmul.f32 %v728, %v680
        %v745 = vmul.f32 %v729, %v681
        %v746 = vmul.f32 %v730, %v682
        %v747 = vmul.f32 %v731, %v683
        %v748 = vmul.f32 %v732, %v684
        %v749 = vmul.f32 %v733, %v685
        %v750 = vmul.f32 %v734, %v686
        %v751 = vmul.f32 %v735, %v687
        %v752 = vmul.f32 %v736, %v688
        %v753 = vmul.f32 %v737, %v689
        %s754 = smul.u32 %s15, 128
        %v755 = vlaneseq
        %v756 = vshrl.u32 %v755, 7
        %v757 = vadd.s32 %v756, 8
        %v758 = vadd.s32 %v756, 16
        %v759 = vadd.s32 %v756, 24
        %v760 = vadd.s32 %v756, 32
        %v761 = vadd.s32 %v756, 40
        %v762 = vadd.s32 %v756, 48
        %v763 = vadd.s32 %v756, 56
        %v764 = vadd.s32 %v756, 64
        %v765 = vadd.s32 %v756, 72
        %v766 = vadd.s32 %v756, 80
        %v767 = vadd.s32 %v756, 88
        %v768 = vadd.s32 %v756, 96
        %v769 = vadd.s32 %v756, 104
        %v770 = vadd.s32 %v756, 112
        %v771 = vadd.s32 %v756, 120
        %v772 = vstv %s754
        %v773 = vadd.s32 %v772, %v756
        %v774 = vadd.s32 %v772, %v757
        %v775 = vadd.s32 %v772, %v758
        %v776 = vadd.s32 %v772, %v759
        %v777 = vadd.s32 %v772, %v760
        %v778 = vadd.s32 %v772, %v761
        %v779 = vadd.s32 %v772, %v762
        %v780 = vadd.s32 %v772, %v763
        %v781 = vadd.s32 %v772, %v764
        %v782 = vadd.s32 %v772, %v765
        %v783 = vadd.s32 %v772, %v766
        %v784 = vadd.s32 %v772, %v767
        %v785 = vadd.s32 %v772, %v768
        %v786 = vadd.s32 %v772, %v769
        %v787 = vadd.s32 %v772, %v770
        %v788 = vadd.s32 %v772, %v771
        %vm789 = vcmp.lt.s32.totalorder %v773, 512
        %vm790 = vcmp.lt.s32.totalorder %v774, 512
        %vm791 = vcmp.lt.s32.totalorder %v775, 512
        %vm792 = vcmp.lt.s32.totalorder %v776, 512
        %vm793 = vcmp.lt.s32.totalorder %v777, 512
        %vm794 = vcmp.lt.s32.totalorder %v778, 512
        %vm795 = vcmp.lt.s32.totalorder %v779, 512
        %vm796 = vcmp.lt.s32.totalorder %v780, 512
        %vm797 = vcmp.lt.s32.totalorder %v781, 512
        %vm798 = vcmp.lt.s32.totalorder %v782, 512
        %vm799 = vcmp.lt.s32.totalorder %v783, 512
        %vm800 = vcmp.lt.s32.totalorder %v784, 512
        %vm801 = vcmp.lt.s32.totalorder %v785, 512
        %vm802 = vcmp.lt.s32.totalorder %v786, 512
        %vm803 = vcmp.lt.s32.totalorder %v787, 512
        %vm804 = vcmp.lt.s32.totalorder %v788, 512
        %v805 = vsel %vm789, 1, 0
        %v806 = vsel %vm790, 1, 0
        %v807 = vsel %vm791, 1, 0
        %v808 = vsel %vm792, 1, 0
        %v809 = vsel %vm793, 1, 0
        %v810 = vsel %vm794, 1, 0
        %v811 = vsel %vm795, 1, 0
        %v812 = vsel %vm796, 1, 0
        %v813 = vsel %vm797, 1, 0
        %v814 = vsel %vm798, 1, 0
        %v815 = vsel %vm799, 1, 0
        %v816 = vsel %vm800, 1, 0
        %v817 = vsel %vm801, 1, 0
        %v818 = vsel %vm802, 1, 0
        %v819 = vsel %vm803, 1, 0
        %v820 = vsel %vm804, 1, 0
        %v821 = vcvt.s32.f32 %v805
        %v822 = vcvt.s32.f32 %v806
        %v823 = vcvt.s32.f32 %v807
        %v824 = vcvt.s32.f32 %v808
        %v825 = vcvt.s32.f32 %v809
        %v826 = vcvt.s32.f32 %v810
        %v827 = vcvt.s32.f32 %v811
        %v828 = vcvt.s32.f32 %v812
        %v829 = vcvt.s32.f32 %v813
        %v830 = vcvt.s32.f32 %v814
        %v831 = vcvt.s32.f32 %v815
        %v832 = vcvt.s32.f32 %v816
        %v833 = vcvt.s32.f32 %v817
        %v834 = vcvt.s32.f32 %v818
        %v835 = vcvt.s32.f32 %v819
        %v836 = vcvt.s32.f32 %v820
        %v837 = vld [vmem:[#allocation2] sm:$0x1]
        %v838 = vmul.f32 %v738, %v821
        %v839 = vmul.f32 %v739, %v822
        %v840 = vmul.f32 %v740, %v823
        %v841 = vmul.f32 %v741, %v824
        %v842 = vmul.f32 %v742, %v825
        %v843 = vmul.f32 %v743, %v826
        %v844 = vmul.f32 %v744, %v827
        %v845 = vmul.f32 %v745, %v828
        %v846 = vmul.f32 %v746, %v829
        %v847 = vmul.f32 %v747, %v830
        %v848 = vmul.f32 %v748, %v831
        %v849 = vmul.f32 %v749, %v832
        %v850 = vmul.f32 %v750, %v833
        %v851 = vmul.f32 %v751, %v834
        %v852 = vmul.f32 %v752, %v835
        %v853 = vmul.f32 %v753, %v836
        %vm854 = vcmask 7168
        %v855 = vsel %vm854, %v838, 0.0
        %v856 = vsel %vm854, %v839, 0.0
        %v857 = vadd.f32 %v855, %v856
        %v858 = vsel %vm854, %v840, 0.0
        %v859 = vadd.f32 %v857, %v858
        %v860 = vsel %vm854, %v841, 0.0
        %v861 = vadd.f32 %v859, %v860
        %v862 = vsel %vm854, %v842, 0.0
        %v863 = vadd.f32 %v861, %v862
        %v864 = vsel %vm854, %v843, 0.0
        %v865 = vadd.f32 %v863, %v864
        %v866 = vsel %vm854, %v844, 0.0
        %v867 = vadd.f32 %v865, %v866
        %v868 = vsel %vm854, %v845, 0.0
        %v869 = vadd.f32 %v867, %v868
        %v870 = vsel %vm854, %v846, 0.0
        %v871 = vadd.f32 %v869, %v870
        %v872 = vsel %vm854, %v847, 0.0
        %v873 = vadd.f32 %v871, %v872
        %v874 = vsel %vm854, %v848, 0.0
        %v875 = vadd.f32 %v873, %v874
        %v876 = vsel %vm854, %v849, 0.0
        %v877 = vadd.f32 %v875, %v876
        %v878 = vsel %vm854, %v850, 0.0
        %v879 = vadd.f32 %v877, %v878
        %v880 = vsel %vm854, %v851, 0.0
        %v881 = vadd.f32 %v879, %v880
        %v882 = vsel %vm854, %v852, 0.0
        %v883 = vadd.f32 %v881, %v882
        %v884 = vsel %vm854, %v853, 0.0
        %v885 = vadd.f32 %v883, %v884
        %886 = vadd.xlane.f32.xlu0 %v885
        %v887 = vpop.xlane.xlu0 %886
        %v888 = vrot.slane %v887, 4
        %v889 = vadd.f32 %v887, %v888
        %v890 = vrot.slane %v889, 2
        %v891 = vadd.f32 %v889, %v890
        %v892 = vrot.slane %v891, 1
        %v893 = vadd.f32 %v891, %v892
        %s894 = vtos %v893
        %v895 = vstv %s894
        %v896 = vadd.f32 %v837, %v895
        %vm897 = vcmask 0
        %898 = vst.msk [vmem:[#allocation2] sm:$0x1] %vm897, %v896
        %p899 = scmp.eq.s32.totalorder %s15, 3
        // Predicated region
        $region37: #{tpu_custom_call.1} parent=31 // pred_check
          %p900 = pneg %p899
        $region38: #{tpu_custom_call.1} parent=31 // pred_check_branch
          %902 = sbr.rel (%p900) target = $region40
        $region39: #{tpu_custom_call.1} parent=31 // pred_region
          %v903 = vld [vmem:[#allocation2] sm:$0x1]
          %v904 = vrcp.pop 512.0
          %v905 = vmul.f32 512.0, %v904
          %v906 = vsub.f32 1.0, %v905
          %v907 = vmul.f32 %v904, %v906
          %v908 = vadd.f32 %v904, %v907
          %vm909 = vweird.f32 %v904
          %v910 = vsel %vm909, %v904, %v908
          %v911 = vmul.f32 %v903, %v910
          %912 = vst.msk [vmem:[#allocation3] sm:$0x1] %vm897, %v911
        $region40: #{tpu_custom_call.1} parent=31 // pred_fallthru
          _
        // Predicated region
        $region41: #{tpu_custom_call.1} parent=31 // pred_check
          %p913 = pneg %p101
        $region42: #{tpu_custom_call.1} parent=31 // pred_check_branch
          %915 = sbr.rel (%p913) target = $region44
        $region43: #{tpu_custom_call.1} parent=31 // pred_region
          %917 = vsyncadd [#allocation4], 0
          %s919 = sshll.u32 [#allocation3], 4
          %s920 = int_to_ptr.vmem [resolvable:$true] %s919
          %s921 = sshll.u32 %s3, 4
          %s922 = int_to_ptr.hbm [resolvable:$true] %s921
          %924 = dma.vmem_to_hbm [thread:$0]  %s920, 16, %s922, [#allocation4]
        $region44: #{tpu_custom_call.1} parent=31 // pred_fallthru
          _
        // Predicated region
        $region45: #{tpu_custom_call.1} parent=31 // pred_check
          %p925 = pneg %p101
        $region46: #{tpu_custom_call.1} parent=31 // pred_check_branch
          %927 = sbr.rel (%p925) target = $region48
        $region47: #{tpu_custom_call.1} parent=31 // pred_region
          %929 = dma.done [#allocation4], 16
        $region48: #{tpu_custom_call.1} parent=31 // pred_fallthru
          _
      $region32: #{tpu_custom_call.1} parent=5 // pred_fallthru
        _
      %p930 = scmp.le.s32.totalorder 2, %s10
      // Predicated region
      $region49: #{tpu_custom_call.1} parent=5 // pred_check
        %p931 = pneg %p930
      $region50: #{tpu_custom_call.1} parent=5 // pred_check_branch
        %933 = sbr.rel (%p931) target = $region52
      $region51: #{tpu_custom_call.1} parent=5 // pred_region
        %s934 = ssub.s32 %s10, 2
      $region52: #{tpu_custom_call.1} parent=5 // pred_fallthru
        _
    $region6: #{tpu_custom_call.1} parent=1 // loop_footer
      %s14 = sadd.s32 1, %s10
    $region7: #{tpu_custom_call.1} parent=1 // loop_footer_branch
      %9 = sbr.rel target = $region3
    $region8: #{tpu_custom_call.1} parent=1 // loop_exit
      _
    %935 = vsyncpa [#allocation4], 1
    %s936 = scalar_lea.sflag [#allocation4], 1
    %937 = vsyncpa %s936, 1

</llo_original>
